<compile_context>
chip_gen: v6e
topology: v6e:2x2x1
jax: 0.10.0
libtpu: 0.0.40
codegen_flags: <defaults>
</compile_context>

<pallas_src>
import jax
import jax.numpy as jnp
from jax.experimental import pallas as pl
from jax.experimental.pallas import tpu as pltpu

EPS = 1e-5


def _make_stats_kernel(n_valid: int, tile_n: int, n_pad: int):
    """Phase 0: BN1 stats.  Phase 1: BN1+ReLU -> Linear2, BN2 stats, h2 writeback."""
    inv_n = 1.0 / float(n_valid)
    need_mask = n_pad != n_valid  # padded rows exist -> mask them out of layer-2 stats

    def kernel(x_ref, w1_ref, w2_ref, p1_ref, p2_ref, h2_ref, bn2_ref,
               stat1_ref, stat2_ref):
        phase = pl.program_id(0)          # 0: L1 stats, 1: L2 stats + h2 out
        i = pl.program_id(1)              # batch-tile index
        last = pl.num_programs(1) - 1

        # Linear(64,64) on the MXU.  Bias omitted: cancelled by BN mean subtraction.
        h1 = jnp.dot(x_ref[...], w1_ref[...], preferred_element_type=jnp.float32)

        # ---------------- phase 0: per-feature sum / sumsq of h1 ----------------
        @pl.when(jnp.logical_and(phase == 0, i == 0))
        def _():
            stat1_ref[...] = jnp.zeros_like(stat1_ref)

        @pl.when(phase == 0)
        def _():
            # Padded x rows are zero and there is no bias, so they contribute 0 here.
            stat1_ref[0:1, :] += jnp.sum(h1, axis=0, keepdims=True)
            stat1_ref[1:2, :] += jnp.sum(h1 * h1, axis=0, keepdims=True)

        @pl.when(jnp.logical_and(phase == 0, i == last))
        def _():
            # Fold BN1 into one scale/shift, stored in-place in stat1.
            s_sum = stat1_ref[0:1, :]
            s_sq = stat1_ref[1:2, :]
            mean = s_sum * inv_n
            # Single-pass variance (E[h^2]-E[h]^2), clamped at 0; adequate at 1e-4 tol.
            var = jnp.maximum(s_sq * inv_n - mean * mean, 0.0)
            scale = p1_ref[0:1, :] * jax.lax.rsqrt(var + EPS)
            shift = p1_ref[1:2, :] - mean * scale
            stat1_ref[0:1, :] = scale
            stat1_ref[1:2, :] = shift

        # ------ phase 1: BN1+ReLU -> Linear(64,32); accumulate BN2 stats; emit h2 ------
        @pl.when(jnp.logical_and(phase == 1, i == 0))
        def _():
            stat2_ref[...] = jnp.zeros_like(stat2_ref)

        @pl.when(phase == 1)
        def _():
            a1 = jnp.maximum(h1 * stat1_ref[0:1, :] + stat1_ref[1:2, :], 0.0)
            h2 = jnp.dot(a1, w2_ref[...], preferred_element_type=jnp.float32)
            h2_ref[...] = h2                     # pre-BN2 activations -> HBM

            def acc(v):
                stat2_ref[0:1, :] += jnp.sum(v, axis=0, keepdims=True)
                stat2_ref[1:2, :] += jnp.sum(v * v, axis=0, keepdims=True)

            if need_mask:
                # Only the last tile has padded rows -> keep the mask off hot tiles.
                @pl.when(i == last)
                def _():
                    rows = jax.lax.broadcasted_iota(jnp.int32, (tile_n, 1), 0) + i * tile_n
                    acc(jnp.where(rows < n_valid, h2, 0.0))

                @pl.when(i != last)
                def _():
                    acc(h2)
            else:
                acc(h2)

        @pl.when(jnp.logical_and(phase == 1, i == last))
        def _():
            s_sum = stat2_ref[0:1, :]
            s_sq = stat2_ref[1:2, :]
            mean = s_sum * inv_n
            var = jnp.maximum(s_sq * inv_n - mean * mean, 0.0)
            scale = p2_ref[0:1, :] * jax.lax.rsqrt(var + EPS)
            bn2_ref[0:1, :] = scale
            bn2_ref[1:2, :] = p2_ref[1:2, :] - mean * scale

    return kernel


def _bn_relu_kernel(h_ref, p_ref, o_ref):
    """Final BN2 scale/shift + ReLU; purely elementwise (batch axis is 'parallel')."""
    o_ref[...] = jnp.maximum(h_ref[...] * p_ref[0:1, :] + p_ref[1:2, :], 0.0)


def mlp_block(x, w1, g1, be1, w2, g2, be2, *, tile_n=4096):
    """Fused MLPBlock forward.  x: (N, 64) f32.  w1/w2 are (in, out) = torch weight.T."""
    n = x.shape[0]
    assert x.shape[1] == 64

    # Batch tile: whole (sublane-rounded) batch when small, else `tile_n` rows.
    if n <= tile_n:
        tn = max(8, ((n + 7) // 8) * 8)
    else:
        tn = tile_n
        assert tn % 8 == 0, "tile_n must be a multiple of 8"
    n_pad = ((n + tn - 1) // tn) * tn
    if n_pad != n:
        x = jnp.pad(x, ((0, n_pad - n), (0, 0)))   # zero rows: no effect on BN1 stats
    nbt = n_pad // tn

    # Pack per-feature BN params into one (2, C) slab per BN (fewer DMA descriptors).
    p1 = jnp.concatenate([g1.reshape(1, 64), be1.reshape(1, 64)], 0).astype(jnp.float32)
    p2 = jnp.concatenate([g2.reshape(1, 32), be2.reshape(1, 32)], 0).astype(jnp.float32)

    # VMEM guard: very large tiles (e.g. 8192 rows) can brush the v5e 16 MiB scoped
    # default even though per-tile data easily fits physical VMEM.
    est_vmem = 2 * (tn * 64 * 4) + 2 * (tn * 32 * 4) + tn * (64 + 64 + 32) * 4 + (2 << 20)
    cp_kwargs = {}
    if est_vmem > 12 * 1024 * 1024:
        cp_kwargs["vmem_limit_bytes"] = min(2 * est_vmem, 56 * 1024 * 1024)

    stats_kernel = _make_stats_kernel(n, tn, n_pad)

    # Pass 1+2 (single call): BN1 stats, then BN1+ReLU -> Linear2 -> BN2 stats + h2.
    h2_pre, bn2 = pl.pallas_call(
        stats_kernel,
        out_shape=(jax.ShapeDtypeStruct((n_pad, 32), jnp.float32),
                   jax.ShapeDtypeStruct((2, 32), jnp.float32)),
        grid_spec=pltpu.PrefetchScalarGridSpec(
            num_scalar_prefetch=0,
            grid=(2, nbt),                                     # (phase, batch tile)
            in_specs=[
                pl.BlockSpec((tn, 64), lambda p, i: (i, 0)),   # x tile (read twice)
                pl.BlockSpec((64, 64), lambda p, i: (0, 0)),   # w1 (resident)
                pl.BlockSpec((64, 32), lambda p, i: (0, 0)),   # w2 (resident)
                pl.BlockSpec((2, 64), lambda p, i: (0, 0)),    # [gamma1; beta1]
                pl.BlockSpec((2, 32), lambda p, i: (0, 0)),    # [gamma2; beta2]
            ],
            out_specs=[
                # Phase-aware: pinned to block 0 while p==0 (no garbage flushes),
                # streams one h2 tile per step during phase 1.
                pl.BlockSpec((tn, 32), lambda p, i: (i * p, 0)),
                pl.BlockSpec((2, 32), lambda p, i: (0, 0)),    # folded BN2 scale/shift
            ],
            scratch_shapes=[
                pltpu.VMEM((2, 64), jnp.float32),  # BN1: [sum; sumsq] -> [scale; shift]
                pltpu.VMEM((2, 32), jnp.float32),  # BN2: [sum; sumsq]
            ],
        ),
        # Phase order and running stats must stay sequential on one core.
        compiler_params=pltpu.CompilerParams(
            dimension_semantics=("arbitrary", "arbitrary"), **cp_kwargs),
        cost_estimate=pl.CostEstimate(
            flops=20480 * n_pad, transcendentals=0,
            bytes_accessed=640 * n_pad + 64 * 1024),
    )(x, w1, w2, p1, p2)

    # Pass 3: BN2 scale/shift + ReLU.  No cross-tile dependency -> 'parallel' batch axis
    # (lets v7x use both TensorCores for ~40-50% of the HBM traffic).
    out = pl.pallas_call(
        _bn_relu_kernel,
        out_shape=jax.ShapeDtypeStruct((n_pad, 32), jnp.float32),
        grid_spec=pltpu.PrefetchScalarGridSpec(
            num_scalar_prefetch=0,
            grid=(nbt,),
            in_specs=[
                pl.BlockSpec((tn, 32), lambda i: (i, 0)),
                pl.BlockSpec((2, 32), lambda i: (0, 0)),
            ],
            out_specs=pl.BlockSpec((tn, 32), lambda i: (i, 0)),
        ),
        compiler_params=pltpu.CompilerParams(dimension_semantics=("parallel",)),
        cost_estimate=pl.CostEstimate(
            flops=96 * n_pad, transcendentals=0, bytes_accessed=256 * n_pad),
    )(h2_pre, bn2)

    return out[:n] if n_pad != n else out


def reference(x, w1, b1, g1, be1, w2, b2, g2, be2):
    """Pure-JAX reference matching the PyTorch module (biases included)."""
    h = x @ w1 + b1
    m, v = jnp.mean(h, 0, keepdims=True), jnp.var(h, 0, keepdims=True)
    h = jnp.maximum((h - m) * jax.lax.rsqrt(v + EPS) * g1 + be1, 0.0)
    h2 = h @ w2 + b2
    m2, v2 = jnp.mean(h2, 0, keepdims=True), jnp.var(h2, 0, keepdims=True)
    return jnp.maximum((h2 - m2) * jax.lax.rsqrt(v2 + EPS) * g2 + be2, 0.0)


if __name__ == "__main__":
    key = jax.random.PRNGKey(0)
    ks = jax.random.split(key, 9)

    # PyTorch-like init.  Linear biases feed only the reference: they cancel exactly
    # under training-mode BatchNorm, so the kernel never reads them.
    lim = 1.0 / jnp.sqrt(64.0)
    w1 = jax.random.uniform(ks[1], (64, 64), jnp.float32, -lim, lim)   # (in, out) = W.T
    b1 = jax.random.uniform(ks[2], (1, 64), jnp.float32, -lim, lim)
    w2 = jax.random.uniform(ks[3], (64, 32), jnp.float32, -lim, lim)
    b2 = jax.random.uniform(ks[4], (1, 32), jnp.float32, -lim, lim)
    g1 = 1.0 + 0.1 * jax.random.normal(ks[5], (1, 64), jnp.float32)
    be1 = 0.1 * jax.random.normal(ks[6], (1, 64), jnp.float32)
    g2 = 1.0 + 0.1 * jax.random.normal(ks[7], (1, 32), jnp.float32)
    be2 = 0.1 * jax.random.normal(ks[8], (1, 32), jnp.float32)

    # Case 1: tiny batch, single tile, no padding.
    x8 = jax.random.normal(ks[0], (8, 64), jnp.float32)
    out8 = jax.block_until_ready(mlp_block(x8, w1, g1, be1, w2, g2, be2))
    ref8 = reference(x8, w1, b1, g1, be1, w2, b2, g2, be2)
    assert out8.shape == (8, 32)
    assert jnp.allclose(out8, ref8, atol=1e-4, rtol=1e-4), "case 1 mismatch vs reference"

    # Case 2: multi-tile grid + ragged batch (exercises tiled stats + last-tile mask).
    x30 = jax.random.normal(jax.random.fold_in(key, 1), (30, 64), jnp.float32)
    out30 = jax.block_until_ready(mlp_block(x30, w1, g1, be1, w2, g2, be2, tile_n=16))
    ref30 = reference(x30, w1, b1, g1, be1, w2, b2, g2, be2)
    assert out30.shape == (30, 32)
    assert jnp.allclose(out30, ref30, atol=1e-4, rtol=1e-4), "case 2 mismatch vs reference"

    print("KERNEL_OK")
</pallas_src>

<mosaic_0001>
module attributes {stable_mosaic.version = 11 : i64} {
  func.func @kernel(%arg0: i32, %arg1: i32, %arg2: memref<8x64xf32, #tpu.memory_space<vmem>>, %arg3: memref<64x64xf32, #tpu.memory_space<vmem>>, %arg4: memref<64x32xf32, #tpu.memory_space<vmem>>, %arg5: memref<2x64xf32, #tpu.memory_space<vmem>>, %arg6: memref<2x32xf32, #tpu.memory_space<vmem>>, %arg7: memref<8x32xf32, #tpu.memory_space<vmem>>, %arg8: memref<2x32xf32, #tpu.memory_space<vmem>>, %arg9: memref<2x64xf32, #tpu.memory_space<vmem>>, %arg10: memref<2x32xf32, #tpu.memory_space<vmem>>) attributes {dimension_semantics = [#tpu.dimension_semantics<arbitrary>, #tpu.dimension_semantics<arbitrary>], iteration_bounds = array<i64: 2, 1>, scalar_prefetch = 0 : i64, scratch_operands = 2 : i64, tpu.core_type = #tpu.core_type<tc>, window_params = [{transform_indices = @transform_0, window_bounds = array<i64: 8, 64>}, {pipeline_mode = #tpu.pipeline_mode<synchronous>, transform_indices = @transform_1, window_bounds = array<i64: 64, 64>}, {pipeline_mode = #tpu.pipeline_mode<synchronous>, transform_indices = @transform_2, window_bounds = array<i64: 64, 32>}, {pipeline_mode = #tpu.pipeline_mode<synchronous>, transform_indices = @transform_3, window_bounds = array<i64: 2, 64>}, {pipeline_mode = #tpu.pipeline_mode<synchronous>, transform_indices = @transform_4, window_bounds = array<i64: 2, 32>}, {transform_indices = @transform_5, window_bounds = array<i64: 8, 32>}, {pipeline_mode = #tpu.pipeline_mode<synchronous>, transform_indices = @transform_6, window_bounds = array<i64: 2, 32>}]} {
    %c0 = arith.constant 0 : index
    %c0_0 = arith.constant 0 : index
    %0 = vector.load %arg2[%c0, %c0_0] : memref<8x64xf32, #tpu.memory_space<vmem>>, vector<8x64xf32>
    %c0_1 = arith.constant 0 : index
    %c0_2 = arith.constant 0 : index
    %1 = vector.load %arg3[%c0_1, %c0_2] : memref<64x64xf32, #tpu.memory_space<vmem>>, vector<64x64xf32>
    %cst = arith.constant dense<0.000000e+00> : vector<8x64xf32>
    %2 = tpu.matmul %0, %1, %cst {dimension_numbers = #tpu.dot_dimension_numbers<[1], [0], [0], [1], [0, 0, 1, 1], [], []>} : vector<8x64xf32>, vector<64x64xf32>, vector<8x64xf32> -> vector<8x64xf32>
    %c0_i32 = arith.constant 0 : i32
    %3 = arith.cmpi eq, %arg0, %c0_i32 : i32
    %c0_i32_3 = arith.constant 0 : i32
    %4 = arith.cmpi eq, %arg1, %c0_i32_3 : i32
    %5 = arith.andi %3, %4 : i1
    %6 = arith.extui %5 : i1 to i32
    %c0_i32_4 = arith.constant 0 : i32
    %7 = arith.cmpi ne, %6, %c0_i32_4 : i32
    scf.if %7 {
      %cst_17 = arith.constant 0.000000e+00 : f32
      %29 = vector.broadcast %cst_17 : f32 to vector<2x64xf32>
      %c0_18 = arith.constant 0 : index
      %c0_19 = arith.constant 0 : index
      %30 = vector.load %arg9[%c0_18, %c0_19] : memref<2x64xf32, #tpu.memory_space<vmem>>, vector<2x64xf32>
      tpu.vector_store %arg9[%c0_18, %c0_19], %29 {strides = array<i32>} : memref<2x64xf32, #tpu.memory_space<vmem>>, vector<2x64xf32>,
    } else {
    }
    %c0_i32_5 = arith.constant 0 : i32
    %8 = arith.cmpi eq, %arg0, %c0_i32_5 : i32
    %9 = arith.extui %8 : i1 to i32
    %c0_i32_6 = arith.constant 0 : i32
    %10 = arith.cmpi ne, %9, %c0_i32_6 : i32
    scf.if %10 {
      %c0_17 = arith.constant 0 : index
      %c0_18 = arith.constant 0 : index
      %29 = vector.load %arg9[%c0_17, %c0_18] : memref<2x64xf32, #tpu.memory_space<vmem>>, vector<1x64xf32>
      %cst_19 = arith.constant dense<0.000000e+00> : vector<64xf32>
      %30 = vector.multi_reduction <add>, %2, %cst_19 [0] : vector<8x64xf32> to vector<64xf32>
      %31 = vector.shape_cast %30 : vector<64xf32> to vector<1x64xf32>
      %32 = arith.addf %29, %31 : vector<1x64xf32>
      %c0_20 = arith.constant 0 : index
      %c0_21 = arith.constant 0 : index
      %33 = vector.load %arg9[%c0_20, %c0_21] : memref<2x64xf32, #tpu.memory_space<vmem>>, vector<1x64xf32>
      tpu.vector_store %arg9[%c0_20, %c0_21], %32 {strides = array<i32>} : memref<2x64xf32, #tpu.memory_space<vmem>>, vector<1x64xf32>,
      %c1 = arith.constant 1 : index
      %c0_22 = arith.constant 0 : index
      %34 = vector.load %arg9[%c1, %c0_22] : memref<2x64xf32, #tpu.memory_space<vmem>>, vector<1x64xf32>
      %35 = arith.mulf %2, %2 : vector<8x64xf32>
      %cst_23 = arith.constant dense<0.000000e+00> : vector<64xf32>
      %36 = vector.multi_reduction <add>, %35, %cst_23 [0] : vector<8x64xf32> to vector<64xf32>
      %37 = vector.shape_cast %36 : vector<64xf32> to vector<1x64xf32>
      %38 = arith.addf %34, %37 : vector<1x64xf32>
      %c1_24 = arith.constant 1 : index
      %c0_25 = arith.constant 0 : index
      %39 = vector.load %arg9[%c1_24, %c0_25] : memref<2x64xf32, #tpu.memory_space<vmem>>, vector<1x64xf32>
      tpu.vector_store %arg9[%c1_24, %c0_25], %38 {strides = array<i32>} : memref<2x64xf32, #tpu.memory_space<vmem>>, vector<1x64xf32>,
    } else {
    }
    %c0_i32_7 = arith.constant 0 : i32
    %11 = arith.cmpi eq, %arg0, %c0_i32_7 : i32
    %c0_i32_8 = arith.constant 0 : i32
    %12 = arith.cmpi eq, %arg1, %c0_i32_8 : i32
    %13 = arith.andi %11, %12 : i1
    %14 = arith.extui %13 : i1 to i32
    %c0_i32_9 = arith.constant 0 : i32
    %15 = arith.cmpi ne, %14, %c0_i32_9 : i32
    scf.if %15 {
      %c0_17 = arith.constant 0 : index
      %c0_18 = arith.constant 0 : index
      %29 = vector.load %arg9[%c0_17, %c0_18] : memref<2x64xf32, #tpu.memory_space<vmem>>, vector<1x64xf32>
      %c1 = arith.constant 1 : index
      %c0_19 = arith.constant 0 : index
      %30 = vector.load %arg9[%c1, %c0_19] : memref<2x64xf32, #tpu.memory_space<vmem>>, vector<1x64xf32>
      %cst_20 = arith.constant 1.250000e-01 : f32
      %31 = vector.broadcast %cst_20 : f32 to vector<1x64xf32>
      %32 = arith.mulf %29, %31 : vector<1x64xf32>
      %cst_21 = arith.constant 1.250000e-01 : f32
      %33 = vector.broadcast %cst_21 : f32 to vector<1x64xf32>
      %34 = arith.mulf %30, %33 : vector<1x64xf32>
      %35 = arith.mulf %32, %32 : vector<1x64xf32>
      %36 = arith.subf %34, %35 : vector<1x64xf32>
      %cst_22 = arith.constant 0.000000e+00 : f32
      %37 = vector.broadcast %cst_22 : f32 to vector<1x64xf32>
      %38 = arith.maximumf %36, %37 : vector<1x64xf32>
      %c0_23 = arith.constant 0 : index
      %c0_24 = arith.constant 0 : index
      %39 = vector.load %arg5[%c0_23, %c0_24] : memref<2x64xf32, #tpu.memory_space<vmem>>, vector<1x64xf32>
      %cst_25 = arith.constant 9.99999974E-6 : f32
      %40 = vector.broadcast %cst_25 : f32 to vector<1x64xf32>
      %41 = arith.addf %38, %40 : vector<1x64xf32>
      %42 = math.rsqrt %41 : vector<1x64xf32>
      %43 = arith.mulf %39, %42 : vector<1x64xf32>
      %c1_26 = arith.constant 1 : index
      %c0_27 = arith.constant 0 : index
      %44 = vector.load %arg5[%c1_26, %c0_27] : memref<2x64xf32, #tpu.memory_space<vmem>>, vector<1x64xf32>
      %45 = arith.mulf %32, %43 : vector<1x64xf32>
      %46 = arith.subf %44, %45 : vector<1x64xf32>
      %c0_28 = arith.constant 0 : index
      %c0_29 = arith.constant 0 : index
      %47 = vector.load %arg9[%c0_28, %c0_29] : memref<2x64xf32, #tpu.memory_space<vmem>>, vector<1x64xf32>
      tpu.vector_store %arg9[%c0_28, %c0_29], %43 {strides = array<i32>} : memref<2x64xf32, #tpu.memory_space<vmem>>, vector<1x64xf32>,
      %c1_30 = arith.constant 1 : index
      %c0_31 = arith.constant 0 : index
      %48 = vector.load %arg9[%c1_30, %c0_31] : memref<2x64xf32, #tpu.memory_space<vmem>>, vector<1x64xf32>
      tpu.vector_store %arg9[%c1_30, %c0_31], %46 {strides = array<i32>} : memref<2x64xf32, #tpu.memory_space<vmem>>, vector<1x64xf32>,
    } else {
    }
    %c1_i32 = arith.constant 1 : i32
    %16 = arith.cmpi eq, %arg0, %c1_i32 : i32
    %c0_i32_10 = arith.constant 0 : i32
    %17 = arith.cmpi eq, %arg1, %c0_i32_10 : i32
    %18 = arith.andi %16, %17 : i1
    %19 = arith.extui %18 : i1 to i32
    %c0_i32_11 = arith.constant 0 : i32
    %20 = arith.cmpi ne, %19, %c0_i32_11 : i32
    scf.if %20 {
      %cst_17 = arith.constant 0.000000e+00 : f32
      %29 = vector.broadcast %cst_17 : f32 to vector<2x32xf32>
      %c0_18 = arith.constant 0 : index
      %c0_19 = arith.constant 0 : index
      %30 = vector.load %arg10[%c0_18, %c0_19] : memref<2x32xf32, #tpu.memory_space<vmem>>, vector<2x32xf32>
      tpu.vector_store %arg10[%c0_18, %c0_19], %29 {strides = array<i32>} : memref<2x32xf32, #tpu.memory_space<vmem>>, vector<2x32xf32>,
    } else {
    }
    %c1_i32_12 = arith.constant 1 : i32
    %21 = arith.cmpi eq, %arg0, %c1_i32_12 : i32
    %22 = arith.extui %21 : i1 to i32
    %c0_i32_13 = arith.constant 0 : i32
    %23 = arith.cmpi ne, %22, %c0_i32_13 : i32
    scf.if %23 {
      %c0_17 = arith.constant 0 : index
      %c0_18 = arith.constant 0 : index
      %29 = vector.load %arg9[%c0_17, %c0_18] : memref<2x64xf32, #tpu.memory_space<vmem>>, vector<1x64xf32>
      %30 = vector.broadcast %29 : vector<1x64xf32> to vector<8x64xf32>
      %31 = arith.mulf %2, %30 : vector<8x64xf32>
      %c1 = arith.constant 1 : index
      %c0_19 = arith.constant 0 : index
      %32 = vector.load %arg9[%c1, %c0_19] : memref<2x64xf32, #tpu.memory_space<vmem>>, vector<1x64xf32>
      %33 = vector.broadcast %32 : vector<1x64xf32> to vector<8x64xf32>
      %34 = arith.addf %31, %33 : vector<8x64xf32>
      %cst_20 = arith.constant 0.000000e+00 : f32
      %35 = vector.broadcast %cst_20 : f32 to vector<8x64xf32>
      %36 = arith.maximumf %34, %35 : vector<8x64xf32>
      %c0_21 = arith.constant 0 : index
      %c0_22 = arith.constant 0 : index
      %37 = vector.load %arg4[%c0_21, %c0_22] : memref<64x32xf32, #tpu.memory_space<vmem>>, vector<64x32xf32>
      %cst_23 = arith.constant dense<0.000000e+00> : vector<8x32xf32>
      %38 = tpu.matmul %36, %37, %cst_23 {dimension_numbers = #tpu.dot_dimension_numbers<[1], [0], [0], [1], [0, 0, 1, 1], [], []>} : vector<8x64xf32>, vector<64x32xf32>, vector<8x32xf32> -> vector<8x32xf32>
      %c0_24 = arith.constant 0 : index
      %c0_25 = arith.constant 0 : index
      %39 = vector.load %arg7[%c0_24, %c0_25] : memref<8x32xf32, #tpu.memory_space<vmem>>, vector<8x32xf32>
      tpu.vector_store %arg7[%c0_24, %c0_25], %38 {strides = array<i32>} : memref<8x32xf32, #tpu.memory_space<vmem>>, vector<8x32xf32>,
      %c0_26 = arith.constant 0 : index
      %c0_27 = arith.constant 0 : index
      %40 = vector.load %arg10[%c0_26, %c0_27] : memref<2x32xf32, #tpu.memory_space<vmem>>, vector<1x32xf32>
      %cst_28 = arith.constant dense<0.000000e+00> : vector<32xf32>
      %41 = vector.multi_reduction <add>, %38, %cst_28 [0] : vector<8x32xf32> to vector<32xf32>
      %42 = vector.shape_cast %41 : vector<32xf32> to vector<1x32xf32>
      %43 = arith.addf %40, %42 : vector<1x32xf32>
      %c0_29 = arith.constant 0 : index
      %c0_30 = arith.constant 0 : index
      %44 = vector.load %arg10[%c0_29, %c0_30] : memref<2x32xf32, #tpu.memory_space<vmem>>, vector<1x32xf32>
      tpu.vector_store %arg10[%c0_29, %c0_30], %43 {strides = array<i32>} : memref<2x32xf32, #tpu.memory_space<vmem>>, vector<1x32xf32>,
      %c1_31 = arith.constant 1 : index
      %c0_32 = arith.constant 0 : index
      %45 = vector.load %arg10[%c1_31, %c0_32] : memref<2x32xf32, #tpu.memory_space<vmem>>, vector<1x32xf32>
      %46 = arith.mulf %38, %38 : vector<8x32xf32>
      %cst_33 = arith.constant dense<0.000000e+00> : vector<32xf32>
      %47 = vector.multi_reduction <add>, %46, %cst_33 [0] : vector<8x32xf32> to vector<32xf32>
      %48 = vector.shape_cast %47 : vector<32xf32> to vector<1x32xf32>
      %49 = arith.addf %45, %48 : vector<1x32xf32>
      %c1_34 = arith.constant 1 : index
      %c0_35 = arith.constant 0 : index
      %50 = vector.load %arg10[%c1_34, %c0_35] : memref<2x32xf32, #tpu.memory_space<vmem>>, vector<1x32xf32>
      tpu.vector_store %arg10[%c1_34, %c0_35], %49 {strides = array<i32>} : memref<2x32xf32, #tpu.memory_space<vmem>>, vector<1x32xf32>,
    } else {
    }
    %c1_i32_14 = arith.constant 1 : i32
    %24 = arith.cmpi eq, %arg0, %c1_i32_14 : i32
    %c0_i32_15 = arith.constant 0 : i32
    %25 = arith.cmpi eq, %arg1, %c0_i32_15 : i32
    %26 = arith.andi %24, %25 : i1
    %27 = arith.extui %26 : i1 to i32
    %c0_i32_16 = arith.constant 0 : i32
    %28 = arith.cmpi ne, %27, %c0_i32_16 : i32
    scf.if %28 {
      %c0_17 = arith.constant 0 : index
      %c0_18 = arith.constant 0 : index
      %29 = vector.load %arg10[%c0_17, %c0_18] : memref<2x32xf32, #tpu.memory_space<vmem>>, vector<1x32xf32>
      %c1 = arith.constant 1 : index
      %c0_19 = arith.constant 0 : index
      %30 = vector.load %arg10[%c1, %c0_19] : memref<2x32xf32, #tpu.memory_space<vmem>>, vector<1x32xf32>
      %cst_20 = arith.constant 1.250000e-01 : f32
      %31 = vector.broadcast %cst_20 : f32 to vector<1x32xf32>
      %32 = arith.mulf %29, %31 : vector<1x32xf32>
      %cst_21 = arith.constant 1.250000e-01 : f32
      %33 = vector.broadcast %cst_21 : f32 to vector<1x32xf32>
      %34 = arith.mulf %30, %33 : vector<1x32xf32>
      %35 = arith.mulf %32, %32 : vector<1x32xf32>
      %36 = arith.subf %34, %35 : vector<1x32xf32>
      %cst_22 = arith.constant 0.000000e+00 : f32
      %37 = vector.broadcast %cst_22 : f32 to vector<1x32xf32>
      %38 = arith.maximumf %36, %37 : vector<1x32xf32>
      %c0_23 = arith.constant 0 : index
      %c0_24 = arith.constant 0 : index
      %39 = vector.load %arg6[%c0_23, %c0_24] : memref<2x32xf32, #tpu.memory_space<vmem>>, vector<1x32xf32>
      %cst_25 = arith.constant 9.99999974E-6 : f32
      %40 = vector.broadcast %cst_25 : f32 to vector<1x32xf32>
      %41 = arith.addf %38, %40 : vector<1x32xf32>
      %42 = math.rsqrt %41 : vector<1x32xf32>
      %43 = arith.mulf %39, %42 : vector<1x32xf32>
      %c0_26 = arith.constant 0 : index
      %c0_27 = arith.constant 0 : index
      %44 = vector.load %arg8[%c0_26, %c0_27] : memref<2x32xf32, #tpu.memory_space<vmem>>, vector<1x32xf32>
      tpu.vector_store %arg8[%c0_26, %c0_27], %43 {strides = array<i32>} : memref<2x32xf32, #tpu.memory_space<vmem>>, vector<1x32xf32>,
      %c1_28 = arith.constant 1 : index
      %c0_29 = arith.constant 0 : index
      %45 = vector.load %arg6[%c1_28, %c0_29] : memref<2x32xf32, #tpu.memory_space<vmem>>, vector<1x32xf32>
      %46 = arith.mulf %32, %43 : vector<1x32xf32>
      %47 = arith.subf %45, %46 : vector<1x32xf32>
      %c1_30 = arith.constant 1 : index
      %c0_31 = arith.constant 0 : index
      %48 = vector.load %arg8[%c1_30, %c0_31] : memref<2x32xf32, #tpu.memory_space<vmem>>, vector<1x32xf32>
      tpu.vector_store %arg8[%c1_30, %c0_31], %47 {strides = array<i32>} : memref<2x32xf32, #tpu.memory_space<vmem>>, vector<1x32xf32>,
    } else {
    }
    return
  }
  func.func @transform_0(%arg0: i32, %arg1: i32) -> (i32, i32) {
    %c0_i32 = arith.constant 0 : i32
    %c0_i32_0 = arith.constant 0 : i32
    return %arg1, %c0_i32 : i32, i32
  }
  func.func @transform_1(%arg0: i32, %arg1: i32) -> (i32, i32) {
    %c0_i32 = arith.constant 0 : i32
    %c0_i32_0 = arith.constant 0 : i32
    %c0_i32_1 = arith.constant 0 : i32
    return %c0_i32, %c0_i32_0 : i32, i32
  }
  func.func @transform_2(%arg0: i32, %arg1: i32) -> (i32, i32) {
    %c0_i32 = arith.constant 0 : i32
    %c0_i32_0 = arith.constant 0 : i32
    %c0_i32_1 = arith.constant 0 : i32
    return %c0_i32, %c0_i32_0 : i32, i32
  }
  func.func @transform_3(%arg0: i32, %arg1: i32) -> (i32, i32) {
    %c0_i32 = arith.constant 0 : i32
    %c0_i32_0 = arith.constant 0 : i32
    %c0_i32_1 = arith.constant 0 : i32
    return %c0_i32, %c0_i32_0 : i32, i32
  }
  func.func @transform_4(%arg0: i32, %arg1: i32) -> (i32, i32) {
    %c0_i32 = arith.constant 0 : i32
    %c0_i32_0 = arith.constant 0 : i32
    %c0_i32_1 = arith.constant 0 : i32
    return %c0_i32, %c0_i32_0 : i32, i32
  }
  func.func @transform_5(%arg0: i32, %arg1: i32) -> (i32, i32) {
    %0 = arith.muli %arg1, %arg0 : i32
    %c0_i32 = arith.constant 0 : i32
    %c0_i32_0 = arith.constant 0 : i32
    return %0, %c0_i32 : i32, i32
  }
  func.func @transform_6(%arg0: i32, %arg1: i32) -> (i32, i32) {
    %c0_i32 = arith.constant 0 : i32
    %c0_i32_0 = arith.constant 0 : i32
    %c0_i32_1 = arith.constant 0 : i32
    return %c0_i32, %c0_i32_0 : i32, i32
  }
}

</mosaic_0001>

<llo_original>
// kernel: tpu_custom_call.1
$region0: #{tpu_custom_call.1}
  #allocation0 [shape = 'u32[]', space=smem, size = 0x4, offset = 0x4, fixed_abs, tag = 'smem constant byte address 0x4 - core index']
  #allocation1 [shape = 'u32[144,128]{1,0:T(1,128)}', space=vmem, size = 0x12000, scoped, tag = 'internal scratch']
  #allocation2 [shape = 'f32[2,64]{1,0:T(2,128)}', space=vmem, size = 0x400, scoped, tag = 'scratch operand']
  #allocation3 [shape = 'f32[2,32]{1,0:T(2,128)}', space=vmem, size = 0x400, scoped, tag = 'scratch operand']
  %s0 = inlined_call_operand.vmem [shape: f32[8,64], index: 0, kind: input, shape index: {}]
  %s1 = inlined_call_operand.vmem [shape: f32[64,64], index: 1, kind: input, shape index: {}]
  %s2 = inlined_call_operand.vmem [shape: f32[64,32], index: 2, kind: input, shape index: {}]
  %s3 = inlined_call_operand.vmem [shape: f32[2,64], index: 3, kind: input, shape index: {}]
  %s4 = inlined_call_operand.vmem [shape: f32[2,32], index: 4, kind: input, shape index: {}]
  %s5 = inlined_call_operand.hbm [shape: f32[8,32], index: 5, kind: output, shape index: {0}]
  %s6 = inlined_call_operand.hbm [shape: f32[2,32], index: 6, kind: output, shape index: {1}]
  %7 = xla_tuple %s5, %s6
  %s8 = sld [smem:[#allocation0]]
  $region85: #{tpu_custom_call.1} parent=0
    _
  %s10 = ssub.s32 1, %s8
  %s11 = scalar_select 0, %s10, %s8
  $region1: #{tpu_custom_call.1} parent=0
    #allocation4 [shape = 'u8[8192]{0}', space=vmem, size = 0x2000, scoped, tag = 'output window, operand 0']
    #allocation5 [shape = 's32[2]{0}', space=sflag, size = 0x8, scoped, tag = 'scoped memory for tpu_custom_call.1']
    #allocation6 [shape = 'u8[1024]{0}', space=vmem, size = 0x400, scoped, tag = 'output window, operand 1, single buffered']
    #allocation7 [shape = 's32[1]{0}', space=sflag, size = 0x4, scoped, tag = 'scoped memory for tpu_custom_call.1']
    %12 = vsyncpa [#allocation5], 0
    %s13 = scalar_lea.sflag [#allocation5], 1
    %14 = vsyncpa %s13, 0
    %15 = vsyncpa [#allocation7], 0
    loop: start=0, step=1, limit=4
    $region2: #{tpu_custom_call.1} parent=1 // loop_pre_header
      _
    $region3: #{tpu_custom_call.1} parent=1 // loop_header
      %s17 = sphi 0, %s21
      %p18 = scmp.ge.s32.totalorder %s17, 4
      %s24 = sphi 0, %s36
      %s25 = sphi 0, %s32
      %s26 = sphi 0, %s24
      %s27 = sphi 0, %s25
      %s28 = sphi 0, %s26
      %s29 = sphi 0, %s27
      %s39 = sphi 0, %s41
      %s42 = sphi 0, %s39
      %s43 = sphi 0, %s42
      %s59 = sphi 0, %s43
      %s63 = sphi 0, %s63
      %s65 = sphi 0, %s63
      %s66 = sphi 0, %s65
      %s80 = sphi 0, %s66
      %s84 = sphi 0, %s84
      %s86 = sphi 0, %s84
      %s87 = sphi 0, %s86
      %s101 = sphi 0, %s87
      %s105 = sphi 0, %s105
      %s107 = sphi 0, %s105
      %s108 = sphi 0, %s107
      %s122 = sphi 0, %s108
      %s126 = sphi 0, %s126
      %s128 = sphi 0, %s126
      %s129 = sphi 0, %s128
      %s143 = sphi 0, %s129
      %s151 = sphi 0, %s153
      %s154 = sphi 0, %s151
      %s155 = sphi 0, %s154
      %s171 = sphi 0, %s155
      %s175 = sphi 0, %s175
      %s177 = sphi 0, %s175
      %s178 = sphi 0, %s177
      %s192 = sphi 0, %s178
    $region4: #{tpu_custom_call.1} parent=1 // loop_header_branch
      %20 = sbr.rel (%p18) target = $region8
    $region5: #{tpu_custom_call.1} parent=1 // loop_body
      %s22 = ssub.s32 %s17, 1
      %s23 = ssub.s32 %s17, 2
      %s30 = sadd.s32 1, %s25
      %p31 = scmp.ge.s32.totalorder %s30, 1
      %s32 = scalar_select %p31, 0, %s30
      %s33 = sadd.s32 1, %s24
      %s34 = scalar_select %p31, %s33, %s24
      %p35 = scmp.ge.s32.totalorder %s34, 2
      %s36 = scalar_select %p35, 0, %s34
      %s37 = ssub.s32 %s25, %s32
      %p38 = scmp.eq.s32.totalorder %s37, 0
      %s40 = sadd.s32 %s39, 1
      %s41 = scalar_select %p38, %s39, %s40
      %p44 = pneg %p38
      %p45 = scmp.eq.s32.totalorder %s17, 1
      %p46 = por %p44, %p45
      %p47 = scmp.ne.s32.totalorder %s39, %s42
      %p48 = scmp.eq.s32.totalorder %s17, 0
      %p49 = por %p47, %p48
      %p50 = scmp.ne.s32.totalorder %s39, %s42
      %p51 = scmp.eq.s32.totalorder %s22, 1
      %p52 = por %p50, %p51
      %p53 = scmp.ne.s32.totalorder %s42, %s43
      %p54 = scmp.eq.s32.totalorder %s22, 0
      %p55 = por %p53, %p54
      %p56 = scmp.ne.s32.totalorder %s42, %s43
      %p57 = scmp.eq.s32.totalorder %s23, 1
      %p58 = por %p56, %p57
      %p60 = scmp.ne.s32.totalorder %s43, %s59
      %p61 = scmp.eq.s32.totalorder %s23, 0
      %p62 = por %p60, %p61
      %s64 = sadd.s32 %s63, 1
      %p67 = scmp.eq.s32.totalorder %s17, 1
      %p68 = scmp.ne.s32.totalorder %s63, %s65
      %p69 = scmp.eq.s32.totalorder %s17, 0
      %p70 = por %p68, %p69
      %p71 = scmp.ne.s32.totalorder %s63, %s65
      %p72 = scmp.eq.s32.totalorder %s22, 1
      %p73 = por %p71, %p72
      %p74 = scmp.ne.s32.totalorder %s65, %s66
      %p75 = scmp.eq.s32.totalorder %s22, 0
      %p76 = por %p74, %p75
      %p77 = scmp.ne.s32.totalorder %s65, %s66
      %p78 = scmp.eq.s32.totalorder %s23, 1
      %p79 = por %p77, %p78
      %p81 = scmp.ne.s32.totalorder %s66, %s80
      %p82 = scmp.eq.s32.totalorder %s23, 0
      %p83 = por %p81, %p82
      %s85 = sadd.s32 %s84, 1
      %p88 = scmp.eq.s32.totalorder %s17, 1
      %p89 = scmp.ne.s32.totalorder %s84, %s86
      %p90 = scmp.eq.s32.totalorder %s17, 0
      %p91 = por %p89, %p90
      %p92 = scmp.ne.s32.totalorder %s84, %s86
      %p93 = scmp.eq.s32.totalorder %s22, 1
      %p94 = por %p92, %p93
      %p95 = scmp.ne.s32.totalorder %s86, %s87
      %p96 = scmp.eq.s32.totalorder %s22, 0
      %p97 = por %p95, %p96
      %p98 = scmp.ne.s32.totalorder %s86, %s87
      %p99 = scmp.eq.s32.totalorder %s23, 1
      %p100 = por %p98, %p99
      %p102 = scmp.ne.s32.totalorder %s87, %s101
      %p103 = scmp.eq.s32.totalorder %s23, 0
      %p104 = por %p102, %p103
      %s106 = sadd.s32 %s105, 1
      %p109 = scmp.eq.s32.totalorder %s17, 1
      %p110 = scmp.ne.s32.totalorder %s105, %s107
      %p111 = scmp.eq.s32.totalorder %s17, 0
      %p112 = por %p110, %p111
      %p113 = scmp.ne.s32.totalorder %s105, %s107
      %p114 = scmp.eq.s32.totalorder %s22, 1
      %p115 = por %p113, %p114
      %p116 = scmp.ne.s32.totalorder %s107, %s108
      %p117 = scmp.eq.s32.totalorder %s22, 0
      %p118 = por %p116, %p117
      %p119 = scmp.ne.s32.totalorder %s107, %s108
      %p120 = scmp.eq.s32.totalorder %s23, 1
      %p121 = por %p119, %p120
      %p123 = scmp.ne.s32.totalorder %s108, %s122
      %p124 = scmp.eq.s32.totalorder %s23, 0
      %p125 = por %p123, %p124
      %s127 = sadd.s32 %s126, 1
      %p130 = scmp.eq.s32.totalorder %s17, 1
      %p131 = scmp.ne.s32.totalorder %s126, %s128
      %p132 = scmp.eq.s32.totalorder %s17, 0
      %p133 = por %p131, %p132
      %p134 = scmp.ne.s32.totalorder %s126, %s128
      %p135 = scmp.eq.s32.totalorder %s22, 1
      %p136 = por %p134, %p135
      %p137 = scmp.ne.s32.totalorder %s128, %s129
      %p138 = scmp.eq.s32.totalorder %s22, 0
      %p139 = por %p137, %p138
      %p140 = scmp.ne.s32.totalorder %s128, %s129
      %p141 = scmp.eq.s32.totalorder %s23, 1
      %p142 = por %p140, %p141
      %p144 = scmp.ne.s32.totalorder %s129, %s143
      %p145 = scmp.eq.s32.totalorder %s23, 0
      %p146 = por %p144, %p145
      %s147 = smul.u32 %s25, %s24
      %s148 = smul.u32 %s32, %s36
      %s149 = ssub.s32 %s147, %s148
      %p150 = scmp.eq.s32.totalorder %s149, 0
      %s152 = sadd.s32 %s151, 1
      %s153 = scalar_select %p150, %s151, %s152
      %p156 = pneg %p150
      %p157 = scmp.eq.s32.totalorder %s17, 1
      %p158 = por %p156, %p157
      %p159 = scmp.ne.s32.totalorder %s151, %s154
      %p160 = scmp.eq.s32.totalorder %s17, 0
      %p161 = por %p159, %p160
      %p162 = scmp.ne.s32.totalorder %s151, %s154
      %p163 = scmp.eq.s32.totalorder %s22, 1
      %p164 = por %p162, %p163
      %p165 = scmp.ne.s32.totalorder %s154, %s155
      %p166 = scmp.eq.s32.totalorder %s22, 0
      %p167 = por %p165, %p166
      %p168 = scmp.ne.s32.totalorder %s154, %s155
      %p169 = scmp.eq.s32.totalorder %s23, 1
      %p170 = por %p168, %p169
      %p172 = scmp.ne.s32.totalorder %s155, %s171
      %p173 = scmp.eq.s32.totalorder %s23, 0
      %p174 = por %p172, %p173
      %s176 = sadd.s32 %s175, 1
      %p179 = scmp.eq.s32.totalorder %s17, 1
      %p180 = scmp.ne.s32.totalorder %s175, %s177
      %p181 = scmp.eq.s32.totalorder %s17, 0
      %p182 = por %p180, %p181
      %p183 = scmp.ne.s32.totalorder %s175, %s177
      %p184 = scmp.eq.s32.totalorder %s22, 1
      %p185 = por %p183, %p184
      %p186 = scmp.ne.s32.totalorder %s177, %s178
      %p187 = scmp.eq.s32.totalorder %s22, 0
      %p188 = por %p186, %p187
      %p189 = scmp.ne.s32.totalorder %s177, %s178
      %p190 = scmp.eq.s32.totalorder %s23, 1
      %p191 = por %p189, %p190
      %p193 = scmp.ne.s32.totalorder %s178, %s192
      %p194 = scmp.eq.s32.totalorder %s23, 0
      %p195 = por %p193, %p194
      %p196 = scmp.le.s32.totalorder 1, %s17
      %p197 = scmp.lt.s32.totalorder %s17, 3
      %p198 = pnand %p196, %p197
      %p199 = pneg %p198
      // Predicated region
      $region9: #{tpu_custom_call.1} parent=5 // pred_check
        _
      $region10: #{tpu_custom_call.1} parent=5 // pred_check_branch
        %201 = sbr.rel (%p198) target = $region12
      $region11: #{tpu_custom_call.1} parent=5 // pred_region
        %s202 = ssub.s32 %s17, 1
        // Predicated region
        $region13: #{tpu_custom_call.1} parent=11 // pred_check
          %p203 = pneg %p55
        $region14: #{tpu_custom_call.1} parent=11 // pred_check_branch
          %205 = sbr.rel (%p203) target = $region16
        $region15: #{tpu_custom_call.1} parent=11 // pred_region
          %p206 = scmp.lt.s32.totalorder %s27, 0
          %s207 = scalar_select %p206, %s27, 0
          %s208 = smul.addr %s207, 8
          %s209 = scalar_lea.vmem %s0, %s208
        $region16: #{tpu_custom_call.1} parent=11 // pred_fallthru
          _
        // Predicated region
        $region17: #{tpu_custom_call.1} parent=11 // pred_check
          %p210 = pneg %p76
        $region18: #{tpu_custom_call.1} parent=11 // pred_check_branch
          %212 = sbr.rel (%p210) target = $region20
        $region19: #{tpu_custom_call.1} parent=11 // pred_region
          _
        $region20: #{tpu_custom_call.1} parent=11 // pred_fallthru
          _
        // Predicated region
        $region21: #{tpu_custom_call.1} parent=11 // pred_check
          %p213 = pneg %p97
        $region22: #{tpu_custom_call.1} parent=11 // pred_check_branch
          %215 = sbr.rel (%p213) target = $region24
        $region23: #{tpu_custom_call.1} parent=11 // pred_region
          _
        $region24: #{tpu_custom_call.1} parent=11 // pred_fallthru
          _
        // Predicated region
        $region25: #{tpu_custom_call.1} parent=11 // pred_check
          %p216 = pneg %p118
        $region26: #{tpu_custom_call.1} parent=11 // pred_check_branch
          %218 = sbr.rel (%p216) target = $region28
        $region27: #{tpu_custom_call.1} parent=11 // pred_region
          _
        $region28: #{tpu_custom_call.1} parent=11 // pred_fallthru
          _
        // Predicated region
        $region29: #{tpu_custom_call.1} parent=11 // pred_check
          %p219 = pneg %p139
        $region30: #{tpu_custom_call.1} parent=11 // pred_check_branch
          %221 = sbr.rel (%p219) target = $region32
        $region31: #{tpu_custom_call.1} parent=11 // pred_region
          _
        $region32: #{tpu_custom_call.1} parent=11 // pred_fallthru
          _
      $region12: #{tpu_custom_call.1} parent=5 // pred_fallthru
        _
      %p222 = scmp.lt.s32.totalorder %s17, 2
      // Predicated region
      $region33: #{tpu_custom_call.1} parent=5 // pred_check
        %p223 = pneg %p222
      $region34: #{tpu_custom_call.1} parent=5 // pred_check_branch
        %225 = sbr.rel (%p223) target = $region36
      $region35: #{tpu_custom_call.1} parent=5 // pred_region
        _
      $region36: #{tpu_custom_call.1} parent=5 // pred_fallthru
        _
      %p226 = scmp.le.s32.totalorder 1, %s17
      %p227 = scmp.lt.s32.totalorder %s17, 3
      %p228 = pnand %p226, %p227
      %p229 = pneg %p228
      // Predicated region
      $region37: #{tpu_custom_call.1} parent=5 // pred_check
        _
      $region38: #{tpu_custom_call.1} parent=5 // pred_check_branch
        %231 = sbr.rel (%p228) target = $region40
      $region39: #{tpu_custom_call.1} parent=5 // pred_region
        %s232 = ssub.s32 %s17, 1
        %p233 = scmp.lt.s32.totalorder %s27, 0
        %s234 = scalar_select %p233, %s27, 0
        %s235 = smul.addr %s234, 8
        %s236 = scalar_lea.vmem %s0, %s235
        %p237 = pneg %p55
        %p238 = pneg %p52
        %p239 = pneg %p76
        %p240 = pneg %p73
        %p241 = pneg %p97
        %p242 = pneg %p94
        %p243 = pneg %p118
        %p244 = pneg %p115
        %p245 = pneg %p139
        %p246 = pneg %p136
        %p247 = pneg %p167
        %p248 = pneg %p164
        %s249 = sand.u32 %s154, 1
        %s250 = scalar_lea.sflag [#allocation5], %s249
        %s251 = sand.u32 %s154, 1
        %s252 = smul.addr %s251, 8
        %s253 = scalar_lea.vmem [#allocation4], %s252
        %p254 = pneg %p188
        %p255 = pneg %p185
        %p256 = scmp.lt.s32.totalorder %s27, 0
        %s257 = scalar_select %p256, %s27, 0
        %s258 = smul.addr %s257, 8
        %s259 = scalar_lea.vmem %s0, %s258
        %s260 = smul.u32 %s27, %s26
        %v261 = vld [vmem:[%s259] sm:$0xff]
        %v262 = vld [vmem:[%s1] sm:$0xff]
        %v263 = vld [vmem:[%s1 + $0x8] sm:$0xff]
        %v264 = vld [vmem:[%s1 + $0x10] sm:$0xff]
        %v265 = vld [vmem:[%s1 + $0x18] sm:$0xff]
        %v266 = vld [vmem:[%s1 + $0x20] sm:$0xff]
        %v267 = vld [vmem:[%s1 + $0x28] sm:$0xff]
        %v268 = vld [vmem:[%s1 + $0x30] sm:$0xff]
        %v269 = vld [vmem:[%s1 + $0x38] sm:$0xff]
        %vm270 = vcmask 523264
        %v272 = vsel %vm270, %v261, 0
        %274 = vmatprep.subr.mxu0 0.0
        %275 = vmatpush1.msra.mxu0 0.0
        %276 = vmatprep.subr.mxu0 0.0
        %277 = vmatpush1.msra.mxu0 0.0
        %278 = vmatprep.subr.mxu0 0.0
        %279 = vmatpush1.msra.mxu0 0.0
        %280 = vmatprep.subr.mxu0 0.0
        %281 = vmatpush1.msra.mxu0 0.0
        %282 = vmatprep.subr.mxu0 0.0
        %283 = vmatpush1.msra.mxu0 0.0
        %284 = vmatprep.subr.mxu0 0.0
        %285 = vmatpush1.msra.mxu0 0.0
        %286 = vmatprep.subr.mxu0 0.0
        %287 = vmatpush1.msra.mxu0 0.0
        %288 = vmatprep.subr.mxu0 0.0
        %289 = vmatpush1.msra.mxu0 0.0
        %290 = vmatprep.subr.mxu0 0.0
        %291 = vmatpush1.msra.mxu0 %v269
        %292 = vmatprep.subr.mxu0 0.0
        %293 = vmatpush1.msra.mxu0 %v268
        %294 = vmatprep.subr.mxu0 0.0
        %295 = vmatpush1.msra.mxu0 %v267
        %296 = vmatprep.subr.mxu0 0.0
        %297 = vmatpush1.msra.mxu0 %v266
        %298 = vmatprep.subr.mxu0 0.0
        %299 = vmatpush1.msra.mxu0 %v265
        %300 = vmatprep.subr.mxu0 0.0
        %301 = vmatpush1.msra.mxu0 %v264
        %302 = vmatprep.subr.mxu0 0.0
        %303 = vmatpush1.msra.mxu0 %v263
        %304 = vmatprep.subr.mxu0 0.0
        %305 = vmatpush1.msra.mxu0 %v262
        %306 = vmatprep.subr.mxu0 0.0
        %307 = vmatpush2.msra.mxu0 0.0
        %308 = vmatprep.subr.mxu0 0.0
        %309 = vmatpush2.msra.mxu0 0.0
        %310 = vmatprep.subr.mxu0 0.0
        %311 = vmatpush2.msra.mxu0 0.0
        %312 = vmatprep.subr.mxu0 0.0
        %313 = vmatpush2.msra.mxu0 0.0
        %314 = vmatprep.subr.mxu0 0.0
        %315 = vmatpush2.msra.mxu0 0.0
        %316 = vmatprep.subr.mxu0 0.0
        %317 = vmatpush2.msra.mxu0 0.0
        %318 = vmatprep.subr.mxu0 0.0
        %319 = vmatpush2.msra.mxu0 0.0
        %320 = vmatprep.subr.mxu0 0.0
        %321 = vmatpush2.msra.mxu0 0.0
        %322 = vmatprep.subr.mxu0 0.0
        %323 = vmatpush2.msra.mxu0 0.0
        %324 = vmatprep.subr.mxu0 0.0
        %325 = vmatpush2.msra.mxu0 0.0
        %326 = vmatprep.subr.mxu0 0.0
        %327 = vmatpush2.msra.mxu0 0.0
        %328 = vmatprep.subr.mxu0 0.0
        %329 = vmatpush2.msra.mxu0 0.0
        %330 = vmatprep.subr.mxu0 0.0
        %331 = vmatpush2.msra.mxu0 0.0
        %332 = vmatprep.subr.mxu0 0.0
        %333 = vmatpush2.msra.mxu0 0.0
        %334 = vmatprep.subr.mxu0 0.0
        %335 = vmatpush2.msra.mxu0 0.0
        %336 = vmatprep.subr.mxu0 0.0
        %337 = vmatpush2.msra.mxu0 0.0
        %338 = vmatprep.mubr.f32.mxu0 0.0
        %339 = vmatmul.mubr.f32.gmra.mxu0 %v272
        %v340 = vpop.f32.mrf.mxu0
        %v341 = vadd.f32 0.0, %v340
        %v342 = vpop.f32.mrf.mxu0
        %343 = vdwg.mxu0
        %p344 = scmp.eq.s32.totalorder %s26, 0
        %p345 = scmp.eq.s32.totalorder %s27, 0
        %p346 = pnand %p344, %p345
        %p347 = pneg %p346
        // Predicated region
        $region41: #{tpu_custom_call.1} parent=39 // pred_check
          _
        $region42: #{tpu_custom_call.1} parent=39 // pred_check_branch
          %349 = sbr.rel (%p346) target = $region44
        $region43: #{tpu_custom_call.1} parent=39 // pred_region
          %vm350 = vcmask 517120
          %351 = vst.msk [vmem:[#allocation2] sm:$0x3] %vm350, 0.0
        $region44: #{tpu_custom_call.1} parent=39 // pred_fallthru
          _
        // Predicated region
        $region45: #{tpu_custom_call.1} parent=39 // pred_check
          %p352 = pneg %p344
        $region46: #{tpu_custom_call.1} parent=39 // pred_check_branch
          %354 = sbr.rel (%p352) target = $region48
        $region47: #{tpu_custom_call.1} parent=39 // pred_region
          %v355 = vld [vmem:[#allocation2] sm:$0x1]
          %v356 = vsel %vm270, %v341, 0.0
          %v357 = vrot.slane %v356, 4
          %v358 = vadd.f32 %v356, %v357
          %v359 = vrot.slane %v358, 2
          %v360 = vadd.f32 %v358, %v359
          %v361 = vrot.slane %v360, 1
          %v362 = vadd.f32 %v360, %v361
          %v363 = vadd.f32 %v355, %v362
          %vm364 = vcmask 516096
          %365 = vst.msk [vmem:[#allocation2] sm:$0x1] %vm364, %v363
          %v366 = vld [vmem:[#allocation2 + $0x1] sm:$0x1]
          %v367 = vmul.f32 %v341, %v341
          %v368 = vsel %vm270, %v367, 0.0
          %v369 = vrot.slane %v368, 4
          %v370 = vadd.f32 %v368, %v369
          %v371 = vrot.slane %v370, 2
          %v372 = vadd.f32 %v370, %v371
          %v373 = vrot.slane %v372, 1
          %v374 = vadd.f32 %v372, %v373
          %v375 = vadd.f32 %v366, %v374
          %376 = vst.msk [vmem:[#allocation2 + $0x1] sm:$0x1] %vm364, %v375
        $region48: #{tpu_custom_call.1} parent=39 // pred_fallthru
          _
        // Predicated region
        $region49: #{tpu_custom_call.1} parent=39 // pred_check
          _
        $region50: #{tpu_custom_call.1} parent=39 // pred_check_branch
          %378 = sbr.rel (%p346) target = $region52
        $region51: #{tpu_custom_call.1} parent=39 // pred_region
          %v379 = vld [vmem:[#allocation2] sm:$0x1]
          %v380 = vld [vmem:[#allocation2 + $0x1] sm:$0x1]
          %v381 = vmul.f32 %v379, 0.125
          %v382 = vmul.f32 %v380, 0.125
          %v383 = vmul.f32 %v381, %v381
          %v384 = vsub.f32 %v382, %v383
          %v385 = vmax.f32 %v384, 0.0
          %v386 = vld [vmem:[%s3] sm:$0x1]
          %v387 = vadd.f32 %v385, 1e-05
          %v388 = vrsqrt.pop %v387
          %v389 = vmul.f32 %v386, %v388
          %v390 = vld [vmem:[%s3 + $0x1] sm:$0x1]
          %v391 = vmul.f32 %v381, %v389
          %v392 = vsub.f32 %v390, %v391
          %vm393 = vcmask 516096
          %394 = vst.msk [vmem:[#allocation2] sm:$0x1] %vm393, %v389
          %395 = vst.msk [vmem:[#allocation2 + $0x1] sm:$0x1] %vm393, %v392
        $region52: #{tpu_custom_call.1} parent=39 // pred_fallthru
          _
        %p396 = scmp.eq.s32.totalorder %s26, 1
        %p397 = pnand %p396, %p345
        %p398 = pneg %p397
        // Predicated region
        $region53: #{tpu_custom_call.1} parent=39 // pred_check
          _
        $region54: #{tpu_custom_call.1} parent=39 // pred_check_branch
          %400 = sbr.rel (%p397) target = $region56
        $region55: #{tpu_custom_call.1} parent=39 // pred_region
          %vm401 = vcmask 254976
          %402 = vst.msk [vmem:[#allocation3] sm:$0x3] %vm401, 0.0
        $region56: #{tpu_custom_call.1} parent=39 // pred_fallthru
          _
        // Predicated region
        $region57: #{tpu_custom_call.1} parent=39 // pred_check
          %p403 = pneg %p396
        $region58: #{tpu_custom_call.1} parent=39 // pred_check_branch
          %405 = sbr.rel (%p403) target = $region60
        $region59: #{tpu_custom_call.1} parent=39 // pred_region
          %v406 = vld [vmem:[#allocation2] sm:$0x1]
          %v407 = vlaneseq
          %v408 = vshrl.u32 %v407, 7
          %v409 = vsub.s32 0, %v408
          %v410 = vrot.slane %v406, %v409
          %v411 = vmul.f32 %v341, %v410
          %v412 = vld [vmem:[#allocation2 + $0x1] sm:$0x1]
          %v413 = vlaneseq
          %v414 = vshrl.u32 %v413, 7
          %v415 = vsub.s32 0, %v414
          %v416 = vrot.slane %v412, %v415
          %v417 = vadd.f32 %v411, %v416
          %v418 = vmax.f32 %v417, 0.0
          %v419 = vld [vmem:[%s2] sm:$0xff]
          %v420 = vld [vmem:[%s2 + $0x8] sm:$0xff]
          %v421 = vld [vmem:[%s2 + $0x10] sm:$0xff]
          %v422 = vld [vmem:[%s2 + $0x18] sm:$0xff]
          %v423 = vld [vmem:[%s2 + $0x20] sm:$0xff]
          %v424 = vld [vmem:[%s2 + $0x28] sm:$0xff]
          %v425 = vld [vmem:[%s2 + $0x30] sm:$0xff]
          %v426 = vld [vmem:[%s2 + $0x38] sm:$0xff]
          %v428 = vsel %vm270, %v418, 0
          %430 = vmatprep.subr.mxu0 0.0
          %431 = vmatpush1.msra.mxu0 0.0
          %432 = vmatprep.subr.mxu0 0.0
          %433 = vmatpush1.msra.mxu0 0.0
          %434 = vmatprep.subr.mxu0 0.0
          %435 = vmatpush1.msra.mxu0 0.0
          %436 = vmatprep.subr.mxu0 0.0
          %437 = vmatpush1.msra.mxu0 0.0
          %438 = vmatprep.subr.mxu0 0.0
          %439 = vmatpush1.msra.mxu0 0.0
          %440 = vmatprep.subr.mxu0 0.0
          %441 = vmatpush1.msra.mxu0 0.0
          %442 = vmatprep.subr.mxu0 0.0
          %443 = vmatpush1.msra.mxu0 0.0
          %444 = vmatprep.subr.mxu0 0.0
          %445 = vmatpush1.msra.mxu0 0.0
          %446 = vmatprep.subr.mxu0 0.0
          %447 = vmatpush1.msra.mxu0 %v426
          %448 = vmatprep.subr.mxu0 0.0
          %449 = vmatpush1.msra.mxu0 %v425
          %450 = vmatprep.subr.mxu0 0.0
          %451 = vmatpush1.msra.mxu0 %v424
          %452 = vmatprep.subr.mxu0 0.0
          %453 = vmatpush1.msra.mxu0 %v423
          %454 = vmatprep.subr.mxu0 0.0
          %455 = vmatpush1.msra.mxu0 %v422
          %456 = vmatprep.subr.mxu0 0.0
          %457 = vmatpush1.msra.mxu0 %v421
          %458 = vmatprep.subr.mxu0 0.0
          %459 = vmatpush1.msra.mxu0 %v420
          %460 = vmatprep.subr.mxu0 0.0
          %461 = vmatpush1.msra.mxu0 %v419
          %462 = vmatprep.subr.mxu0 0.0
          %463 = vmatpush2.msra.mxu0 0.0
          %464 = vmatprep.subr.mxu0 0.0
          %465 = vmatpush2.msra.mxu0 0.0
          %466 = vmatprep.subr.mxu0 0.0
          %467 = vmatpush2.msra.mxu0 0.0
          %468 = vmatprep.subr.mxu0 0.0
          %469 = vmatpush2.msra.mxu0 0.0
          %470 = vmatprep.subr.mxu0 0.0
          %471 = vmatpush2.msra.mxu0 0.0
          %472 = vmatprep.subr.mxu0 0.0
          %473 = vmatpush2.msra.mxu0 0.0
          %474 = vmatprep.subr.mxu0 0.0
          %475 = vmatpush2.msra.mxu0 0.0
          %476 = vmatprep.subr.mxu0 0.0
          %477 = vmatpush2.msra.mxu0 0.0
          %478 = vmatprep.subr.mxu0 0.0
          %479 = vmatpush2.msra.mxu0 0.0
          %480 = vmatprep.subr.mxu0 0.0
          %481 = vmatpush2.msra.mxu0 0.0
          %482 = vmatprep.subr.mxu0 0.0
          %483 = vmatpush2.msra.mxu0 0.0
          %484 = vmatprep.subr.mxu0 0.0
          %485 = vmatpush2.msra.mxu0 0.0
          %486 = vmatprep.subr.mxu0 0.0
          %487 = vmatpush2.msra.mxu0 0.0
          %488 = vmatprep.subr.mxu0 0.0
          %489 = vmatpush2.msra.mxu0 0.0
          %490 = vmatprep.subr.mxu0 0.0
          %491 = vmatpush2.msra.mxu0 0.0
          %492 = vmatprep.subr.mxu0 0.0
          %493 = vmatpush2.msra.mxu0 0.0
          %494 = vmatprep.mubr.f32.mxu0 0.0
          %495 = vmatmul.mubr.f32.gmra.mxu0 %v428
          %v496 = vpop.f32.mrf.mxu0
          %v497 = vadd.f32 0.0, %v496
          %v498 = vpop.f32.mrf.mxu0
          %499 = vdwg.mxu0
          %vm500 = vcmask 261120
          %501 = vst.msk [vmem:[%s253] sm:$0xff] %vm500, %v497
          %v502 = vld [vmem:[#allocation3] sm:$0x1]
          %v503 = vsel %vm500, %v497, 0.0
          %v504 = vrot.slane %v503, 4
          %v505 = vadd.f32 %v503, %v504
          %v506 = vrot.slane %v505, 2
          %v507 = vadd.f32 %v505, %v506
          %v508 = vrot.slane %v507, 1
          %v509 = vadd.f32 %v507, %v508
          %v510 = vadd.f32 %v502, %v509
          %vm511 = vcmask 253952
          %512 = vst.msk [vmem:[#allocation3] sm:$0x1] %vm511, %v510
          %v513 = vld [vmem:[#allocation3 + $0x1] sm:$0x1]
          %v514 = vmul.f32 %v497, %v497
          %v515 = vsel %vm500, %v514, 0.0
          %v516 = vrot.slane %v515, 4
          %v517 = vadd.f32 %v515, %v516
          %v518 = vrot.slane %v517, 2
          %v519 = vadd.f32 %v517, %v518
          %v520 = vrot.slane %v519, 1
          %v521 = vadd.f32 %v519, %v520
          %v522 = vadd.f32 %v513, %v521
          %523 = vst.msk [vmem:[#allocation3 + $0x1] sm:$0x1] %vm511, %v522
        $region60: #{tpu_custom_call.1} parent=39 // pred_fallthru
          _
        // Predicated region
        $region61: #{tpu_custom_call.1} parent=39 // pred_check
          _
        $region62: #{tpu_custom_call.1} parent=39 // pred_check_branch
          %525 = sbr.rel (%p397) target = $region64
        $region63: #{tpu_custom_call.1} parent=39 // pred_region
          %v526 = vld [vmem:[#allocation3] sm:$0x1]
          %v527 = vld [vmem:[#allocation3 + $0x1] sm:$0x1]
          %v528 = vmul.f32 %v526, 0.125
          %v529 = vmul.f32 %v527, 0.125
          %v530 = vmul.f32 %v528, %v528
          %v531 = vsub.f32 %v529, %v530
          %v532 = vmax.f32 %v531, 0.0
          %v533 = vld [vmem:[%s4] sm:$0x1]
          %v534 = vadd.f32 %v532, 1e-05
          %v535 = vrsqrt.pop %v534
          %v536 = vmul.f32 %v533, %v535
          %vm537 = vcmask 253952
          %538 = vst.msk [vmem:[#allocation6] sm:$0x1] %vm537, %v536
          %v539 = vld [vmem:[%s4 + $0x1] sm:$0x1]
          %v540 = vmul.f32 %v528, %v536
          %v541 = vsub.f32 %v539, %v540
          %542 = vst.msk [vmem:[#allocation6 + $0x1] sm:$0x1] %vm537, %v541
        $region64: #{tpu_custom_call.1} parent=39 // pred_fallthru
          _
        %s543 = sand.u32 %s154, 1
        %s544 = scalar_lea.sflag [#allocation5], %s543
        %s545 = sand.u32 %s154, 1
        %s546 = smul.addr %s545, 8
        %s547 = scalar_lea.vmem [#allocation4], %s546
        // Predicated region
        $region65: #{tpu_custom_call.1} parent=39 // pred_check
          %p548 = pneg %p164
        $region66: #{tpu_custom_call.1} parent=39 // pred_check_branch
          %550 = sbr.rel (%p548) target = $region68
        $region67: #{tpu_custom_call.1} parent=39 // pred_region
          %s551 = smul.u32 %s27, %s26
          %s553 = ssub.s32 128, 128
          %554 = vsyncadd %s544, %s553
          %s555 = smul.addr %s551, 128
          %s556 = scalar_lea.hbm %s5, %s555
          %s558 = sshll.u32 %s547, 4
          %s559 = int_to_ptr.vmem [resolvable:$true] %s558
          %561 = dma.vmem_to_hbm [thread:$0]  %s559, 128, %s556, %s544
        $region68: #{tpu_custom_call.1} parent=39 // pred_fallthru
          _
        // Predicated region
        $region69: #{tpu_custom_call.1} parent=39 // pred_check
          %p562 = pneg %p185
        $region70: #{tpu_custom_call.1} parent=39 // pred_check_branch
          %564 = sbr.rel (%p562) target = $region72
        $region71: #{tpu_custom_call.1} parent=39 // pred_region
          %s566 = ssub.s32 32, 32
          %567 = vsyncadd [#allocation7], %s566
          %s569 = sshll.u32 [#allocation6], 4
          %s570 = int_to_ptr.vmem [resolvable:$true] %s569
          %572 = dma.vmem_to_hbm [thread:$0]  %s570, 32, %s6, [#allocation7]
        $region72: #{tpu_custom_call.1} parent=39 // pred_fallthru
          _
        // Predicated region
        $region73: #{tpu_custom_call.1} parent=39 // pred_check
          %p573 = pneg %p185
        $region74: #{tpu_custom_call.1} parent=39 // pred_check_branch
          %575 = sbr.rel (%p573) target = $region76
        $region75: #{tpu_custom_call.1} parent=39 // pred_region
          %576 = dma.done [#allocation7], 32
        $region76: #{tpu_custom_call.1} parent=39 // pred_fallthru
          _
      $region40: #{tpu_custom_call.1} parent=5 // pred_fallthru
        _
      %p577 = scmp.le.s32.totalorder 2, %s17
      // Predicated region
      $region77: #{tpu_custom_call.1} parent=5 // pred_check
        %p578 = pneg %p577
      $region78: #{tpu_custom_call.1} parent=5 // pred_check_branch
        %580 = sbr.rel (%p578) target = $region80
      $region79: #{tpu_custom_call.1} parent=5 // pred_region
        %s581 = ssub.s32 %s17, 2
        // Predicated region
        $region81: #{tpu_custom_call.1} parent=79 // pred_check
          %p582 = pneg %p170
        $region82: #{tpu_custom_call.1} parent=79 // pred_check_branch
          %584 = sbr.rel (%p582) target = $region84
        $region83: #{tpu_custom_call.1} parent=79 // pred_region
          %s585 = sand.u32 %s155, 1
          %s586 = scalar_lea.sflag [#allocation5], %s585
          %s587 = sand.u32 %s155, 1
          %s588 = smul.addr %s587, 8
          %s589 = scalar_lea.vmem [#allocation4], %s588
          %590 = dma.done %s586, 128
        $region84: #{tpu_custom_call.1} parent=79 // pred_fallthru
          _
      $region80: #{tpu_custom_call.1} parent=5 // pred_fallthru
        _
    $region6: #{tpu_custom_call.1} parent=1 // loop_footer
      %s21 = sadd.s32 1, %s17
    $region7: #{tpu_custom_call.1} parent=1 // loop_footer_branch
      %16 = sbr.rel target = $region3
    $region8: #{tpu_custom_call.1} parent=1 // loop_exit
      _
    %591 = vsyncpa [#allocation5], 1
    %s592 = scalar_lea.sflag [#allocation5], 1
    %593 = vsyncpa %s592, 1
    %594 = vsyncpa [#allocation7], 1

</llo_original>
